<compile_context>
chip_gen: v7x
topology: tpu7x:2x2x1
jax: 0.10.0
libtpu: 0.0.40
codegen_flags: <defaults>
</compile_context>

<pallas_src>
import functools

import jax
import jax.numpy as jnp
from jax.experimental import pallas as pl
from jax.experimental.pallas import tpu as pltpu

_LANE = 128          # last-dim tile (lanes)
_SUBLANE_BF16 = 16   # bf16 packs 16 rows per vreg -> keep batch tiles %16


def _round_up(x, m):
    return ((x + m - 1) // m) * m


def _vmem_capacity_bytes():
    # Query the actual per-core VMEM capacity; fall back to the most
    # conservative value (v7x per-TC 64 MiB) if the query is unavailable.
    try:
        return int(pltpu.get_tpu_info().vmem_capacity_bytes)
    except Exception:
        return 64 * 1024 * 1024


def _vmem_plan_bytes(tb, sp, hp, ap, x_bytes, w_bytes):
    """Static VMEM plan: weights/biases single-buffered, x/out double-buffered,
    plus the h1/h2 intermediates (f32 + bf16 cast copies) the compiler keeps."""
    weights = (sp * hp + hp * hp + hp * ap) * w_bytes      # 1x (Buffered(1))
    biases = (2 * hp + ap) * 4                             # 1x, f32
    x_tiles = 2 * tb * sp * x_bytes                        # double-buffered in
    out_tiles = 2 * tb * ap * 2                            # double-buffered bf16 out
    acts = tb * hp * (4 + 2) * 2                           # h1/h2 f32 + bf16 casts
    return weights + biases + x_tiles + out_tiles + acts


def _policy_mlp_kernel(x_ref, w1_ref, b1_ref, w2_ref, b2_ref, w3_ref, b3_ref,
                       out_ref):
    # Layer 1: Linear(state -> hidden) + ReLU   (bf16 MXU, f32 accumulate)
    x = x_ref[...].astype(w1_ref.dtype)
    h1 = jnp.dot(x, w1_ref[...], preferred_element_type=jnp.float32) + b1_ref[...]
    h1 = jnp.maximum(h1, 0.0)

    # Layer 2: Linear(hidden -> hidden) + ReLU
    h2 = jnp.dot(h1.astype(w2_ref.dtype), w2_ref[...],
                 preferred_element_type=jnp.float32) + b2_ref[...]
    h2 = jnp.maximum(h2, 0.0)

    # Layer 3: Linear(hidden -> action), no activation; emit bf16 (lane-dense)
    out = jnp.dot(h2.astype(w3_ref.dtype), w3_ref[...],
                  preferred_element_type=jnp.float32) + b3_ref[...]
    out_ref[...] = out.astype(out_ref.dtype)


@functools.partial(jax.jit, static_argnames=("action_dim", "batch_tile"))
def policy_network_forward(state, params, *, action_dim, batch_tile=512):
    """Fused MLP forward.

    state:  (B, state_dim) f32
    params: padded params from init_policy_params (bf16 weights, f32 biases).
    Returns (B, action_dim) f32.
    """
    w1, b1 = params["w1"], params["b1"]
    w2, b2 = params["w2"], params["b2"]
    w3, b3 = params["w3"], params["b3"]

    B, S = state.shape
    Sp, Hp = w1.shape
    Ap = w3.shape[1]
    w_bytes = w1.dtype.itemsize
    # x is cast to bf16 whenever a pad pass is needed, else streamed as-is.
    x_bytes = w_bytes if Sp != S else state.dtype.itemsize

    # ---------------- static batch-tile plan ----------------
    TB = min(_round_up(B, _SUBLANE_BF16), _round_up(batch_tile, _SUBLANE_BF16))

    # v7x megacore: ensure >= 2 grid steps when B is big enough so both
    # TensorCores get work (no effect on single-TC v5e/v6e).
    if B >= 32 and _round_up(B, TB) == TB and TB >= 2 * _SUBLANE_BF16:
        TB = _round_up(TB // 2, _SUBLANE_BF16)

    # Shrink TB until the full plan (incl. h1/h2 intermediates) fits VMEM.
    cap = _vmem_capacity_bytes()
    plan_cap = int(cap * 0.9)
    while TB > _SUBLANE_BF16 and _vmem_plan_bytes(TB, Sp, Hp, Ap,
                                                  x_bytes, w_bytes) > plan_cap:
        TB = _round_up(TB // 2, _SUBLANE_BF16)
    # TODO(synk): for hidden_dim >~ 4096 the w2 block itself no longer fits
    # VMEM-resident and needs reduction-axis (out-feature) tiling instead.

    # Re-balance the tile so Bp does not badly overshoot B
    # (e.g. B=300, TB=304 -> 2 steps of 160 rather than one 304-row step).
    nsteps = -(-B // TB)
    TB = _round_up(-(-B // nsteps), _SUBLANE_BF16)
    Bp = nsteps * TB

    vmem_est = _vmem_plan_bytes(TB, Sp, Hp, Ap, x_bytes, w_bytes)
    # Always set the limit (v5e's default scoped VMEM is only 16 MiB); clamp
    # only by the chip's real capacity.
    vmem_limit = min(max(int(vmem_est * 1.25), 16 * 1024 * 1024), plan_cap)

    # ---------------- input staging ----------------
    if (Bp != B) or (Sp != S):
        # Single fused pad+cast pass; zero padding is exact through ReLU.
        x = jnp.pad(state, ((0, Bp - B), (0, Sp - S))).astype(w1.dtype)
    else:
        # No pre-pass at all: stream f32 state, cast inside the kernel.
        x = state

    # Advisory cost estimate so XLA schedules around the custom call.
    cost = pl.CostEstimate(
        flops=2 * Bp * (Sp * Hp + Hp * Hp + Hp * Ap),
        transcendentals=0,
        bytes_accessed=(Bp * Sp * x.dtype.itemsize
                        + (Sp * Hp + Hp * Hp + Hp * Ap) * w_bytes
                        + (2 * Hp + Ap) * 4
                        + Bp * Ap * 2))

    def _const_spec(shape):
        # Constant (grid-invariant) block: single buffer, VMEM-resident.
        return pl.BlockSpec(shape, lambda i: (0, 0),
                            pipeline_mode=pl.Buffered(1))

    out_padded = pl.pallas_call(
        _policy_mlp_kernel,
        out_shape=jax.ShapeDtypeStruct((Bp, Ap), jnp.bfloat16),
        grid=(Bp // TB,),
        in_specs=[
            pl.BlockSpec((TB, Sp), lambda i: (i, 0)),   # x: tiled over batch
            _const_spec((Sp, Hp)),                      # w1 (resident)
            _const_spec((1, Hp)),                       # b1
            _const_spec((Hp, Hp)),                      # w2
            _const_spec((1, Hp)),                       # b2
            _const_spec((Hp, Ap)),                      # w3
            _const_spec((1, Ap)),                       # b3
        ],
        out_specs=pl.BlockSpec((TB, Ap), lambda i: (i, 0)),  # lane-dense (Ap%128==0)
        compiler_params=pltpu.CompilerParams(
            dimension_semantics=("parallel",),
            vmem_limit_bytes=vmem_limit),
        cost_estimate=cost,
    )(x, w1, b1, w2, b2, w3, b3)

    return out_padded[:B, :action_dim].astype(jnp.float32)


def init_policy_params(key, state_dim, action_dim, hidden_dim,
                       weight_dtype=jnp.bfloat16):
    """torch.nn.Linear-style init, zero-padded to TPU tiles at init time.

    Weights are (in_features, out_features) so the kernel computes y = x @ W,
    padded to multiples of 128 on both feature axes and stored in bf16.
    Biases are (1, out_features_padded) f32.  Zero padding is exact: padded
    lanes stay identically zero through ReLU.
    """
    # TODO(synk): on v6e/v7x (2x256x256 MXU) padding hidden_dim to multiples
    # of 256 improves MXU occupancy when the layer-2 matmul is the bottleneck.
    Sp = _round_up(state_dim, _LANE)
    Hp = _round_up(hidden_dim, _LANE)
    Ap = _round_up(action_dim, _LANE)

    ks = jax.random.split(key, 6)

    def linear(kw, kb, fan_in, fan_out, fan_in_p, fan_out_p):
        bound = 1.0 / jnp.sqrt(fan_in)
        w = jax.random.uniform(kw, (fan_in, fan_out), jnp.float32, -bound, bound)
        b = jax.random.uniform(kb, (1, fan_out), jnp.float32, -bound, bound)
        w = jnp.pad(w, ((0, fan_in_p - fan_in), (0, fan_out_p - fan_out)))
        b = jnp.pad(b, ((0, 0), (0, fan_out_p - fan_out)))
        return w.astype(weight_dtype), b  # bias stays f32

    w1, b1 = linear(ks[0], ks[1], state_dim, hidden_dim, Sp, Hp)
    w2, b2 = linear(ks[2], ks[3], hidden_dim, hidden_dim, Hp, Hp)
    w3, b3 = linear(ks[4], ks[5], hidden_dim, action_dim, Hp, Ap)
    return {"w1": w1, "b1": b1, "w2": w2, "b2": b2, "w3": w3, "b3": b3}


def _reference_forward(state, params, action_dim):
    """Pure-JAX reference at the same precision (bf16 weights/output, f32 acc)."""
    Sp = params["w1"].shape[0]
    x = jnp.pad(state, ((0, 0), (0, Sp - state.shape[1]))).astype(params["w1"].dtype)
    h = jnp.dot(x, params["w1"], preferred_element_type=jnp.float32) + params["b1"]
    h = jnp.maximum(h, 0.0)
    h = jnp.dot(h.astype(params["w2"].dtype), params["w2"],
                preferred_element_type=jnp.float32) + params["b2"]
    h = jnp.maximum(h, 0.0)
    out = jnp.dot(h.astype(params["w3"].dtype), params["w3"],
                  preferred_element_type=jnp.float32) + params["b3"]
    return out.astype(jnp.bfloat16).astype(jnp.float32)[:, :action_dim]


if __name__ == "__main__":
    state_dim, action_dim, hidden_dim = 16, 8, 32
    batch = 8

    key = jax.random.PRNGKey(0)
    k_params, k_state = jax.random.split(key)

    params = init_policy_params(k_params, state_dim, action_dim, hidden_dim)
    state = jax.random.normal(k_state, (batch, state_dim), dtype=jnp.float32)

    out = policy_network_forward(state, params, action_dim=action_dim)
    jax.block_until_ready(out)

    ref = _reference_forward(state, params, action_dim)
    assert out.shape == (batch, action_dim)
    assert out.dtype == jnp.float32
    assert jnp.allclose(out, ref, atol=1e-2, rtol=1e-2), (
        f"max abs diff {jnp.max(jnp.abs(out - ref))}")

    print("KERNEL_OK")
</pallas_src>

<mosaic_0001>
module attributes {stable_mosaic.version = 11 : i64} {
  func.func @_policy_mlp_kernel(%arg0: i32, %arg1: memref<16x128xbf16, #tpu.memory_space<vmem>>, %arg2: memref<128x128xbf16, #tpu.memory_space<vmem>>, %arg3: memref<1x128xf32, #tpu.memory_space<vmem>>, %arg4: memref<128x128xbf16, #tpu.memory_space<vmem>>, %arg5: memref<1x128xf32, #tpu.memory_space<vmem>>, %arg6: memref<128x128xbf16, #tpu.memory_space<vmem>>, %arg7: memref<1x128xf32, #tpu.memory_space<vmem>>, %arg8: memref<16x128xbf16, #tpu.memory_space<vmem>>) attributes {dimension_semantics = [#tpu.dimension_semantics<parallel>], iteration_bounds = array<i64: 1>, scalar_prefetch = 0 : i64, scratch_operands = 0 : i64, tpu.core_type = #tpu.core_type<tc>, window_params = [{transform_indices = @transform_0, window_bounds = array<i64: 16, 128>}, {pipeline_mode = #tpu.pipeline_mode<synchronous>, transform_indices = @transform_1, window_bounds = array<i64: 128, 128>}, {pipeline_mode = #tpu.pipeline_mode<synchronous>, transform_indices = @transform_2, window_bounds = array<i64: 1, 128>}, {pipeline_mode = #tpu.pipeline_mode<synchronous>, transform_indices = @transform_3, window_bounds = array<i64: 128, 128>}, {pipeline_mode = #tpu.pipeline_mode<synchronous>, transform_indices = @transform_4, window_bounds = array<i64: 1, 128>}, {pipeline_mode = #tpu.pipeline_mode<synchronous>, transform_indices = @transform_5, window_bounds = array<i64: 128, 128>}, {pipeline_mode = #tpu.pipeline_mode<synchronous>, transform_indices = @transform_6, window_bounds = array<i64: 1, 128>}, {transform_indices = @transform_7, window_bounds = array<i64: 16, 128>}]} {
    %c0 = arith.constant 0 : index
    %c0_0 = arith.constant 0 : index
    %0 = vector.load %arg1[%c0, %c0_0] : memref<16x128xbf16, #tpu.memory_space<vmem>>, vector<16x128xbf16>
    %c0_1 = arith.constant 0 : index
    %c0_2 = arith.constant 0 : index
    %1 = vector.load %arg2[%c0_1, %c0_2] : memref<128x128xbf16, #tpu.memory_space<vmem>>, vector<128x128xbf16>
    %cst = arith.constant dense<0.000000e+00> : vector<16x128xf32>
    %2 = tpu.matmul %0, %1, %cst {dimension_numbers = #tpu.dot_dimension_numbers<[1], [0], [0], [1], [0, 0, 1, 1], [], []>} : vector<16x128xbf16>, vector<128x128xbf16>, vector<16x128xf32> -> vector<16x128xf32>
    %c0_3 = arith.constant 0 : index
    %c0_4 = arith.constant 0 : index
    %3 = vector.load %arg3[%c0_3, %c0_4] : memref<1x128xf32, #tpu.memory_space<vmem>>, vector<1x128xf32>
    %4 = vector.broadcast %3 : vector<1x128xf32> to vector<16x128xf32>
    %5 = arith.addf %2, %4 : vector<16x128xf32>
    %cst_5 = arith.constant 0.000000e+00 : f32
    %6 = vector.broadcast %cst_5 : f32 to vector<16x128xf32>
    %7 = arith.maximumf %5, %6 : vector<16x128xf32>
    %8 = arith.truncf %7 : vector<16x128xf32> to vector<16x128xbf16>
    %c0_6 = arith.constant 0 : index
    %c0_7 = arith.constant 0 : index
    %9 = vector.load %arg4[%c0_6, %c0_7] : memref<128x128xbf16, #tpu.memory_space<vmem>>, vector<128x128xbf16>
    %cst_8 = arith.constant dense<0.000000e+00> : vector<16x128xf32>
    %10 = tpu.matmul %8, %9, %cst_8 {dimension_numbers = #tpu.dot_dimension_numbers<[1], [0], [0], [1], [0, 0, 1, 1], [], []>} : vector<16x128xbf16>, vector<128x128xbf16>, vector<16x128xf32> -> vector<16x128xf32>
    %c0_9 = arith.constant 0 : index
    %c0_10 = arith.constant 0 : index
    %11 = vector.load %arg5[%c0_9, %c0_10] : memref<1x128xf32, #tpu.memory_space<vmem>>, vector<1x128xf32>
    %12 = vector.broadcast %11 : vector<1x128xf32> to vector<16x128xf32>
    %13 = arith.addf %10, %12 : vector<16x128xf32>
    %cst_11 = arith.constant 0.000000e+00 : f32
    %14 = vector.broadcast %cst_11 : f32 to vector<16x128xf32>
    %15 = arith.maximumf %13, %14 : vector<16x128xf32>
    %16 = arith.truncf %15 : vector<16x128xf32> to vector<16x128xbf16>
    %c0_12 = arith.constant 0 : index
    %c0_13 = arith.constant 0 : index
    %17 = vector.load %arg6[%c0_12, %c0_13] : memref<128x128xbf16, #tpu.memory_space<vmem>>, vector<128x128xbf16>
    %cst_14 = arith.constant dense<0.000000e+00> : vector<16x128xf32>
    %18 = tpu.matmul %16, %17, %cst_14 {dimension_numbers = #tpu.dot_dimension_numbers<[1], [0], [0], [1], [0, 0, 1, 1], [], []>} : vector<16x128xbf16>, vector<128x128xbf16>, vector<16x128xf32> -> vector<16x128xf32>
    %c0_15 = arith.constant 0 : index
    %c0_16 = arith.constant 0 : index
    %19 = vector.load %arg7[%c0_15, %c0_16] : memref<1x128xf32, #tpu.memory_space<vmem>>, vector<1x128xf32>
    %20 = vector.broadcast %19 : vector<1x128xf32> to vector<16x128xf32>
    %21 = arith.addf %18, %20 : vector<16x128xf32>
    %22 = arith.truncf %21 : vector<16x128xf32> to vector<16x128xbf16>
    %c0_17 = arith.constant 0 : index
    %c0_18 = arith.constant 0 : index
    %23 = vector.load %arg8[%c0_17, %c0_18] : memref<16x128xbf16, #tpu.memory_space<vmem>>, vector<16x128xbf16>
    tpu.vector_store %arg8[%c0_17, %c0_18], %22 {strides = array<i32>} : memref<16x128xbf16, #tpu.memory_space<vmem>>, vector<16x128xbf16>,
    return
  }
  func.func @transform_0(%arg0: i32) -> (i32, i32) {
    %c0_i32 = arith.constant 0 : i32
    %c0_i32_0 = arith.constant 0 : i32
    return %arg0, %c0_i32 : i32, i32
  }
  func.func @transform_1(%arg0: i32) -> (i32, i32) {
    %c0_i32 = arith.constant 0 : i32
    %c0_i32_0 = arith.constant 0 : i32
    %c0_i32_1 = arith.constant 0 : i32
    return %c0_i32, %c0_i32_0 : i32, i32
  }
  func.func @transform_2(%arg0: i32) -> (i32, i32) {
    %c0_i32 = arith.constant 0 : i32
    %c0_i32_0 = arith.constant 0 : i32
    %c0_i32_1 = arith.constant 0 : i32
    return %c0_i32, %c0_i32_0 : i32, i32
  }
  func.func @transform_3(%arg0: i32) -> (i32, i32) {
    %c0_i32 = arith.constant 0 : i32
    %c0_i32_0 = arith.constant 0 : i32
    %c0_i32_1 = arith.constant 0 : i32
    return %c0_i32, %c0_i32_0 : i32, i32
  }
  func.func @transform_4(%arg0: i32) -> (i32, i32) {
    %c0_i32 = arith.constant 0 : i32
    %c0_i32_0 = arith.constant 0 : i32
    %c0_i32_1 = arith.constant 0 : i32
    return %c0_i32, %c0_i32_0 : i32, i32
  }
  func.func @transform_5(%arg0: i32) -> (i32, i32) {
    %c0_i32 = arith.constant 0 : i32
    %c0_i32_0 = arith.constant 0 : i32
    %c0_i32_1 = arith.constant 0 : i32
    return %c0_i32, %c0_i32_0 : i32, i32
  }
  func.func @transform_6(%arg0: i32) -> (i32, i32) {
    %c0_i32 = arith.constant 0 : i32
    %c0_i32_0 = arith.constant 0 : i32
    %c0_i32_1 = arith.constant 0 : i32
    return %c0_i32, %c0_i32_0 : i32, i32
  }
  func.func @transform_7(%arg0: i32) -> (i32, i32) {
    %c0_i32 = arith.constant 0 : i32
    %c0_i32_0 = arith.constant 0 : i32
    return %arg0, %c0_i32 : i32, i32
  }
}

</mosaic_0001>

<llo_original>
// kernel: policy_network_forward.1
$region0: #{policy_network_forward.1}
  #allocation0 [shape = 'u32[]', space=smem, size = 0x4, offset = 0x4, fixed_abs, tag = 'smem constant byte address 0x4 - core index']
  #allocation1 [shape = 'u32[144,128]{1,0:T(1,128)}', space=vmem, size = 0x12000, scoped, tag = 'internal scratch']
  %s0 = inlined_call_operand.vmem [shape: bf16[16,128], index: 0, kind: input, shape index: {}]
  %s1 = inlined_call_operand.hbm [shape: bf16[128,128], index: 1, kind: input, shape index: {}]
  %s2 = inlined_call_operand.vmem [shape: f32[1,128], index: 2, kind: input, shape index: {}]
  %s3 = inlined_call_operand.hbm [shape: bf16[128,128], index: 3, kind: input, shape index: {}]
  %s4 = inlined_call_operand.vmem [shape: f32[1,128], index: 4, kind: input, shape index: {}]
  %s5 = inlined_call_operand.hbm [shape: bf16[128,128], index: 5, kind: input, shape index: {}]
  %s6 = inlined_call_operand.vmem [shape: f32[1,128], index: 6, kind: input, shape index: {}]
  %s7 = inlined_call_operand.vmem [shape: bf16[16,128], index: 7, kind: output, shape index: {}]
  %s8 = sld [smem:[#allocation0]]
  $region50: #{policy_network_forward.1} parent=0
    _
  %s10 = ssub.s32 1, %s8
  %s11 = scalar_select 0, %s10, %s8
  $region1: #{policy_network_forward.1} parent=0
    #allocation2 [shape = 'u8[32768]{0}', space=vmem, size = 0x8000, scoped, tag = 'input window, operand 1, single buffered']
    #allocation3 [shape = 's32[1]{0}', space=sflag, size = 0x4, scoped, tag = 'scoped memory for policy_network_forward.1']
    #allocation4 [shape = 'u8[32768]{0}', space=vmem, size = 0x8000, scoped, tag = 'input window, operand 3, single buffered']
    #allocation5 [shape = 's32[1]{0}', space=sflag, size = 0x4, scoped, tag = 'scoped memory for policy_network_forward.1']
    #allocation6 [shape = 'u8[32768]{0}', space=vmem, size = 0x8000, scoped, tag = 'input window, operand 5, single buffered']
    %12 = vsyncpa [#allocation3], 0
    %13 = vsyncpa [#allocation5], 0
    // Predicated region
    $region2: #{policy_network_forward.1} parent=1 // pred_check
      _
    $region3: #{policy_network_forward.1} parent=1 // pred_check_branch
      %15 = sbr.rel (0) target = $region5
    $region4: #{policy_network_forward.1} parent=1 // pred_region
      _
    $region5: #{policy_network_forward.1} parent=1 // pred_fallthru
      _
    // Predicated region
    $region6: #{policy_network_forward.1} parent=1 // pred_check
      _
    $region7: #{policy_network_forward.1} parent=1 // pred_check_branch
      %17 = sbr.rel (0) target = $region9
    $region8: #{policy_network_forward.1} parent=1 // pred_region
      %s19 = ssub.s32 1024, 1024
      %20 = vsyncadd [#allocation3], %s19
      %s21 = sshll.u32 [#allocation2], 4
      %s22 = int_to_ptr.vmem [resolvable:$true] %s21
      %27 = dma.hbm_to_vmem [thread:$0]  %s1, 1024, %s22, [#allocation3], 64, 64, 4
    $region9: #{policy_network_forward.1} parent=1 // pred_fallthru
      _
    // Predicated region
    $region10: #{policy_network_forward.1} parent=1 // pred_check
      _
    $region11: #{policy_network_forward.1} parent=1 // pred_check_branch
      %29 = sbr.rel (0) target = $region13
    $region12: #{policy_network_forward.1} parent=1 // pred_region
      _
    $region13: #{policy_network_forward.1} parent=1 // pred_fallthru
      _
    // Predicated region
    $region14: #{policy_network_forward.1} parent=1 // pred_check
      _
    $region15: #{policy_network_forward.1} parent=1 // pred_check_branch
      %31 = sbr.rel (0) target = $region17
    $region16: #{policy_network_forward.1} parent=1 // pred_region
      %s33 = ssub.s32 1024, 1024
      %34 = vsyncadd [#allocation5], %s33
      %s35 = sshll.u32 [#allocation4], 4
      %s36 = int_to_ptr.vmem [resolvable:$true] %s35
      %41 = dma.hbm_to_vmem [thread:$0]  %s3, 1024, %s36, [#allocation5], 64, 64, 4
    $region17: #{policy_network_forward.1} parent=1 // pred_fallthru
      _
    // Predicated region
    $region18: #{policy_network_forward.1} parent=1 // pred_check
      _
    $region19: #{policy_network_forward.1} parent=1 // pred_check_branch
      %43 = sbr.rel (0) target = $region21
    $region20: #{policy_network_forward.1} parent=1 // pred_region
      _
    $region21: #{policy_network_forward.1} parent=1 // pred_fallthru
      _
    // Predicated region
    $region22: #{policy_network_forward.1} parent=1 // pred_check
      _
    $region23: #{policy_network_forward.1} parent=1 // pred_check_branch
      %45 = sbr.rel (0) target = $region25
    $region24: #{policy_network_forward.1} parent=1 // pred_region
      %s47 = ssub.s32 1024, 1024
      %48 = vsyncadd [#allocation5], %s47
      %s49 = sshll.u32 [#allocation6], 4
      %s50 = int_to_ptr.vmem [resolvable:$true] %s49
      %55 = dma.hbm_to_vmem [thread:$0]  %s5, 1024, %s50, [#allocation5], 64, 64, 4
    $region25: #{policy_network_forward.1} parent=1 // pred_fallthru
      _
    // Predicated region
    $region26: #{policy_network_forward.1} parent=1 // pred_check
      _
    $region27: #{policy_network_forward.1} parent=1 // pred_check_branch
      %57 = sbr.rel (0) target = $region29
    $region28: #{policy_network_forward.1} parent=1 // pred_region
      _
    $region29: #{policy_network_forward.1} parent=1 // pred_fallthru
      _
    // Predicated region
    $region30: #{policy_network_forward.1} parent=1 // pred_check
      _
    $region31: #{policy_network_forward.1} parent=1 // pred_check_branch
      %59 = sbr.rel (0) target = $region33
    $region32: #{policy_network_forward.1} parent=1 // pred_region
      %60 = dma.done [#allocation3], 1024
    $region33: #{policy_network_forward.1} parent=1 // pred_fallthru
      _
    // Predicated region
    $region34: #{policy_network_forward.1} parent=1 // pred_check
      _
    $region35: #{policy_network_forward.1} parent=1 // pred_check_branch
      %62 = sbr.rel (0) target = $region37
    $region36: #{policy_network_forward.1} parent=1 // pred_region
      %63 = dma.done [#allocation5], 1024
    $region37: #{policy_network_forward.1} parent=1 // pred_fallthru
      _
    // Predicated region
    $region38: #{policy_network_forward.1} parent=1 // pred_check
      _
    $region39: #{policy_network_forward.1} parent=1 // pred_check_branch
      %65 = sbr.rel (0) target = $region41
    $region40: #{policy_network_forward.1} parent=1 // pred_region
      %66 = dma.done [#allocation5], 1024
    $region41: #{policy_network_forward.1} parent=1 // pred_fallthru
      _
    %v68 = vld [vmem:[%s0] sm:$0xf]
    %v69 = vld [vmem:[%s0 + $0x4] sm:$0xf]
    %v70 = vld [vmem:[#allocation2] sm:$0xf]
    %v71 = vld [vmem:[#allocation2 + $0x4] sm:$0xf]
    %v72 = vld [vmem:[#allocation2 + $0x8] sm:$0xf]
    %v73 = vld [vmem:[#allocation2 + $0xc] sm:$0xf]
    %v74 = vld [vmem:[#allocation2 + $0x10] sm:$0xf]
    %v75 = vld [vmem:[#allocation2 + $0x14] sm:$0xf]
    %v76 = vld [vmem:[#allocation2 + $0x18] sm:$0xf]
    %v77 = vld [vmem:[#allocation2 + $0x1c] sm:$0xf]
    %v78 = vld [vmem:[#allocation2 + $0x20] sm:$0xf]
    %v79 = vld [vmem:[#allocation2 + $0x24] sm:$0xf]
    %v80 = vld [vmem:[#allocation2 + $0x28] sm:$0xf]
    %v81 = vld [vmem:[#allocation2 + $0x2c] sm:$0xf]
    %v82 = vld [vmem:[#allocation2 + $0x30] sm:$0xf]
    %v83 = vld [vmem:[#allocation2 + $0x34] sm:$0xf]
    %v84 = vld [vmem:[#allocation2 + $0x38] sm:$0xf]
    %v85 = vld [vmem:[#allocation2 + $0x3c] sm:$0xf]
    %v86 = vld [vmem:[%s2] sm:$0x1]
    %v88 = vlaneseq
    %v89 = vshrl.u32 %v88, 7
    %v90 = vsub.s32 0, %v89
    %v91 = vrot.slane %v86, %v90
    %v95 = vunpack.c.l.b16 %v68
    %v96 = vunpack.c.l.b16 %v69
    %v97 = vpack.c.b16 %v96, %v95
    %v115 = vunpack.c.l.b16 %v70
    %v116 = vunpack.c.l.b16 %v71
    %v117 = vunpack.c.l.b16 %v72
    %v118 = vunpack.c.l.b16 %v73
    %v119 = vunpack.c.l.b16 %v74
    %v120 = vunpack.c.l.b16 %v75
    %v121 = vunpack.c.l.b16 %v76
    %v122 = vunpack.c.l.b16 %v77
    %v123 = vunpack.c.l.b16 %v78
    %v124 = vunpack.c.l.b16 %v79
    %v125 = vunpack.c.l.b16 %v80
    %v126 = vunpack.c.l.b16 %v81
    %v127 = vunpack.c.l.b16 %v82
    %v128 = vunpack.c.l.b16 %v83
    %v129 = vunpack.c.l.b16 %v84
    %v130 = vunpack.c.l.b16 %v85
    %v131 = vpack.c.b16 %v116, %v115
    %v132 = vpack.c.b16 %v118, %v117
    %v133 = vpack.c.b16 %v120, %v119
    %v134 = vpack.c.b16 %v122, %v121
    %v135 = vpack.c.b16 %v124, %v123
    %v136 = vpack.c.b16 %v126, %v125
    %v137 = vpack.c.b16 %v128, %v127
    %v138 = vpack.c.b16 %v130, %v129
    %147 = vmatprep.subr.bf16.mxu0 0
    %148 = vmatpush1.bf16.msra.mxu0 %v131
    %149 = vmatprep.subr.bf16.mxu0 0
    %150 = vmatpush1.bf16.msra.mxu0 %v132
    %151 = vmatprep.subr.bf16.mxu0 0
    %152 = vmatpush1.bf16.msra.mxu0 %v133
    %153 = vmatprep.subr.bf16.mxu0 0
    %154 = vmatpush1.bf16.msra.mxu0 %v134
    %155 = vmatprep.subr.bf16.mxu0 0
    %156 = vmatpush1.bf16.msra.mxu0 %v135
    %157 = vmatprep.subr.bf16.mxu0 0
    %158 = vmatpush1.bf16.msra.mxu0 %v136
    %159 = vmatprep.subr.bf16.mxu0 0
    %160 = vmatpush1.bf16.msra.mxu0 %v137
    %161 = vmatprep.subr.bf16.mxu0 0
    %162 = vmatpush1.bf16.msra.mxu0 %v138
    %163 = vmatprep.subr.bf16.mxu0 0
    %164 = vmatpush1.bf16.msra.mxu0 0
    %165 = vmatprep.subr.bf16.mxu0 0
    %166 = vmatpush1.bf16.msra.mxu0 0
    %167 = vmatprep.subr.bf16.mxu0 0
    %168 = vmatpush1.bf16.msra.mxu0 0
    %169 = vmatprep.subr.bf16.mxu0 0
    %170 = vmatpush1.bf16.msra.mxu0 0
    %171 = vmatprep.subr.bf16.mxu0 0
    %172 = vmatpush1.bf16.msra.mxu0 0
    %173 = vmatprep.subr.bf16.mxu0 0
    %174 = vmatpush1.bf16.msra.mxu0 0
    %175 = vmatprep.subr.bf16.mxu0 0
    %176 = vmatpush1.bf16.msra.mxu0 0
    %177 = vmatprep.subr.bf16.mxu0 0
    %178 = vmatpush1.bf16.msra.mxu0 0
    %179 = vmatprep.mubr.bf16.mxu0 0
    %180 = vmatmul.mubr.bf16.gmra.mrb[0].mxu0 %v97
    %v181 = vpop.f32.mrb[0].mxu0
    %v182 = vadd.f32 %v91, %v181
    %v183 = vpop.f32.mrb[0].mxu0
    %v184 = vpop.f32.mrb[0].mxu0
    %v185 = vadd.f32 %v91, %v184
    %v186 = vpop.f32.mrb[0].mxu0
    %187 = vdwg.mxu0
    %v188 = vmax.f32 %v182, 0.0
    %v189 = vmax.f32 %v185, 0.0
    %v190 = vpack.c.bf16 %v189, %v188
    %v191 = vld [vmem:[#allocation4] sm:$0xf]
    %v192 = vld [vmem:[#allocation4 + $0x4] sm:$0xf]
    %v193 = vld [vmem:[#allocation4 + $0x8] sm:$0xf]
    %v194 = vld [vmem:[#allocation4 + $0xc] sm:$0xf]
    %v195 = vld [vmem:[#allocation4 + $0x10] sm:$0xf]
    %v196 = vld [vmem:[#allocation4 + $0x14] sm:$0xf]
    %v197 = vld [vmem:[#allocation4 + $0x18] sm:$0xf]
    %v198 = vld [vmem:[#allocation4 + $0x1c] sm:$0xf]
    %v199 = vld [vmem:[#allocation4 + $0x20] sm:$0xf]
    %v200 = vld [vmem:[#allocation4 + $0x24] sm:$0xf]
    %v201 = vld [vmem:[#allocation4 + $0x28] sm:$0xf]
    %v202 = vld [vmem:[#allocation4 + $0x2c] sm:$0xf]
    %v203 = vld [vmem:[#allocation4 + $0x30] sm:$0xf]
    %v204 = vld [vmem:[#allocation4 + $0x34] sm:$0xf]
    %v205 = vld [vmem:[#allocation4 + $0x38] sm:$0xf]
    %v206 = vld [vmem:[#allocation4 + $0x3c] sm:$0xf]
    %v207 = vld [vmem:[%s4] sm:$0x1]
    %v209 = vlaneseq
    %v210 = vshrl.u32 %v209, 7
    %v211 = vsub.s32 0, %v210
    %v212 = vrot.slane %v207, %v211
    %v230 = vunpack.c.l.b16 %v191
    %v231 = vunpack.c.l.b16 %v192
    %v232 = vunpack.c.l.b16 %v193
    %v233 = vunpack.c.l.b16 %v194
    %v234 = vunpack.c.l.b16 %v195
    %v235 = vunpack.c.l.b16 %v196
    %v236 = vunpack.c.l.b16 %v197
    %v237 = vunpack.c.l.b16 %v198
    %v238 = vunpack.c.l.b16 %v199
    %v239 = vunpack.c.l.b16 %v200
    %v240 = vunpack.c.l.b16 %v201
    %v241 = vunpack.c.l.b16 %v202
    %v242 = vunpack.c.l.b16 %v203
    %v243 = vunpack.c.l.b16 %v204
    %v244 = vunpack.c.l.b16 %v205
    %v245 = vunpack.c.l.b16 %v206
    %v246 = vpack.c.b16 %v231, %v230
    %v247 = vpack.c.b16 %v233, %v232
    %v248 = vpack.c.b16 %v235, %v234
    %v249 = vpack.c.b16 %v237, %v236
    %v250 = vpack.c.b16 %v239, %v238
    %v251 = vpack.c.b16 %v241, %v240
    %v252 = vpack.c.b16 %v243, %v242
    %v253 = vpack.c.b16 %v245, %v244
    %262 = vmatprep.subr.bf16.mxu0 0
    %263 = vmatpush1.bf16.msra.mxu0 %v246
    %264 = vmatprep.subr.bf16.mxu0 0
    %265 = vmatpush1.bf16.msra.mxu0 %v247
    %266 = vmatprep.subr.bf16.mxu0 0
    %267 = vmatpush1.bf16.msra.mxu0 %v248
    %268 = vmatprep.subr.bf16.mxu0 0
    %269 = vmatpush1.bf16.msra.mxu0 %v249
    %270 = vmatprep.subr.bf16.mxu0 0
    %271 = vmatpush1.bf16.msra.mxu0 %v250
    %272 = vmatprep.subr.bf16.mxu0 0
    %273 = vmatpush1.bf16.msra.mxu0 %v251
    %274 = vmatprep.subr.bf16.mxu0 0
    %275 = vmatpush1.bf16.msra.mxu0 %v252
    %276 = vmatprep.subr.bf16.mxu0 0
    %277 = vmatpush1.bf16.msra.mxu0 %v253
    %278 = vmatprep.subr.bf16.mxu0 0
    %279 = vmatpush1.bf16.msra.mxu0 0
    %280 = vmatprep.subr.bf16.mxu0 0
    %281 = vmatpush1.bf16.msra.mxu0 0
    %282 = vmatprep.subr.bf16.mxu0 0
    %283 = vmatpush1.bf16.msra.mxu0 0
    %284 = vmatprep.subr.bf16.mxu0 0
    %285 = vmatpush1.bf16.msra.mxu0 0
    %286 = vmatprep.subr.bf16.mxu0 0
    %287 = vmatpush1.bf16.msra.mxu0 0
    %288 = vmatprep.subr.bf16.mxu0 0
    %289 = vmatpush1.bf16.msra.mxu0 0
    %290 = vmatprep.subr.bf16.mxu0 0
    %291 = vmatpush1.bf16.msra.mxu0 0
    %292 = vmatprep.subr.bf16.mxu0 0
    %293 = vmatpush1.bf16.msra.mxu0 0
    %294 = vmatprep.mubr.bf16.mxu0 0
    %295 = vmatmul.mubr.bf16.gmra.mrb[0].mxu0 %v190
    %v296 = vpop.f32.mrb[0].mxu0
    %v297 = vadd.f32 %v212, %v296
    %v298 = vpop.f32.mrb[0].mxu0
    %v299 = vpop.f32.mrb[0].mxu0
    %v300 = vadd.f32 %v212, %v299
    %v301 = vpop.f32.mrb[0].mxu0
    %302 = vdwg.mxu0
    %v303 = vmax.f32 %v297, 0.0
    %v304 = vmax.f32 %v300, 0.0
    %v305 = vpack.c.bf16 %v304, %v303
    %v306 = vld [vmem:[#allocation6] sm:$0xf]
    %v307 = vld [vmem:[#allocation6 + $0x4] sm:$0xf]
    %v308 = vld [vmem:[#allocation6 + $0x8] sm:$0xf]
    %v309 = vld [vmem:[#allocation6 + $0xc] sm:$0xf]
    %v310 = vld [vmem:[#allocation6 + $0x10] sm:$0xf]
    %v311 = vld [vmem:[#allocation6 + $0x14] sm:$0xf]
    %v312 = vld [vmem:[#allocation6 + $0x18] sm:$0xf]
    %v313 = vld [vmem:[#allocation6 + $0x1c] sm:$0xf]
    %v314 = vld [vmem:[#allocation6 + $0x20] sm:$0xf]
    %v315 = vld [vmem:[#allocation6 + $0x24] sm:$0xf]
    %v316 = vld [vmem:[#allocation6 + $0x28] sm:$0xf]
    %v317 = vld [vmem:[#allocation6 + $0x2c] sm:$0xf]
    %v318 = vld [vmem:[#allocation6 + $0x30] sm:$0xf]
    %v319 = vld [vmem:[#allocation6 + $0x34] sm:$0xf]
    %v320 = vld [vmem:[#allocation6 + $0x38] sm:$0xf]
    %v321 = vld [vmem:[#allocation6 + $0x3c] sm:$0xf]
    %v322 = vld [vmem:[%s6] sm:$0x1]
    %v324 = vlaneseq
    %v325 = vshrl.u32 %v324, 7
    %v326 = vsub.s32 0, %v325
    %v327 = vrot.slane %v322, %v326
    %v345 = vunpack.c.l.b16 %v306
    %v346 = vunpack.c.l.b16 %v307
    %v347 = vunpack.c.l.b16 %v308
    %v348 = vunpack.c.l.b16 %v309
    %v349 = vunpack.c.l.b16 %v310
    %v350 = vunpack.c.l.b16 %v311
    %v351 = vunpack.c.l.b16 %v312
    %v352 = vunpack.c.l.b16 %v313
    %v353 = vunpack.c.l.b16 %v314
    %v354 = vunpack.c.l.b16 %v315
    %v355 = vunpack.c.l.b16 %v316
    %v356 = vunpack.c.l.b16 %v317
    %v357 = vunpack.c.l.b16 %v318
    %v358 = vunpack.c.l.b16 %v319
    %v359 = vunpack.c.l.b16 %v320
    %v360 = vunpack.c.l.b16 %v321
    %v361 = vpack.c.b16 %v346, %v345
    %v362 = vpack.c.b16 %v348, %v347
    %v363 = vpack.c.b16 %v350, %v349
    %v364 = vpack.c.b16 %v352, %v351
    %v365 = vpack.c.b16 %v354, %v353
    %v366 = vpack.c.b16 %v356, %v355
    %v367 = vpack.c.b16 %v358, %v357
    %v368 = vpack.c.b16 %v360, %v359
    %377 = vmatprep.subr.bf16.mxu0 0
    %378 = vmatpush1.bf16.msra.mxu0 %v361
    %379 = vmatprep.subr.bf16.mxu0 0
    %380 = vmatpush1.bf16.msra.mxu0 %v362
    %381 = vmatprep.subr.bf16.mxu0 0
    %382 = vmatpush1.bf16.msra.mxu0 %v363
    %383 = vmatprep.subr.bf16.mxu0 0
    %384 = vmatpush1.bf16.msra.mxu0 %v364
    %385 = vmatprep.subr.bf16.mxu0 0
    %386 = vmatpush1.bf16.msra.mxu0 %v365
    %387 = vmatprep.subr.bf16.mxu0 0
    %388 = vmatpush1.bf16.msra.mxu0 %v366
    %389 = vmatprep.subr.bf16.mxu0 0
    %390 = vmatpush1.bf16.msra.mxu0 %v367
    %391 = vmatprep.subr.bf16.mxu0 0
    %392 = vmatpush1.bf16.msra.mxu0 %v368
    %393 = vmatprep.subr.bf16.mxu0 0
    %394 = vmatpush1.bf16.msra.mxu0 0
    %395 = vmatprep.subr.bf16.mxu0 0
    %396 = vmatpush1.bf16.msra.mxu0 0
    %397 = vmatprep.subr.bf16.mxu0 0
    %398 = vmatpush1.bf16.msra.mxu0 0
    %399 = vmatprep.subr.bf16.mxu0 0
    %400 = vmatpush1.bf16.msra.mxu0 0
    %401 = vmatprep.subr.bf16.mxu0 0
    %402 = vmatpush1.bf16.msra.mxu0 0
    %403 = vmatprep.subr.bf16.mxu0 0
    %404 = vmatpush1.bf16.msra.mxu0 0
    %405 = vmatprep.subr.bf16.mxu0 0
    %406 = vmatpush1.bf16.msra.mxu0 0
    %407 = vmatprep.subr.bf16.mxu0 0
    %408 = vmatpush1.bf16.msra.mxu0 0
    %409 = vmatprep.mubr.bf16.mxu0 0
    %410 = vmatmul.mubr.bf16.gmra.mrb[0].mxu0 %v305
    %v411 = vpop.f32.mrb[0].mxu0
    %v412 = vadd.f32 %v327, %v411
    %v413 = vpop.f32.mrb[0].mxu0
    %v414 = vpop.f32.mrb[0].mxu0
    %v415 = vadd.f32 %v327, %v414
    %v416 = vpop.f32.mrb[0].mxu0
    %417 = vdwg.mxu0
    %v418 = vpack.c.bf16 %v415, %v412
    %v420 = vunpack.c.l.b16 %v418
    %v421 = vunpack.c.h.b16 %v418
    %v422 = vpack.c.b16 %v420, %v420
    %v423 = vpack.c.b16 %v421, %v421
    %426 = vst [vmem:[%s7] sm:$0xf] %v422
    %427 = vst [vmem:[%s7 + $0x4] sm:$0xf] %v423
    // Predicated region
    $region42: #{policy_network_forward.1} parent=1 // pred_check
      _
    $region43: #{policy_network_forward.1} parent=1 // pred_check_branch
      %429 = sbr.rel (0) target = $region45
    $region44: #{policy_network_forward.1} parent=1 // pred_region
      _
    $region45: #{policy_network_forward.1} parent=1 // pred_fallthru
      _
    // Predicated region
    $region46: #{policy_network_forward.1} parent=1 // pred_check
      _
    $region47: #{policy_network_forward.1} parent=1 // pred_check_branch
      %431 = sbr.rel (0) target = $region49
    $region48: #{policy_network_forward.1} parent=1 // pred_region
      _
    $region49: #{policy_network_forward.1} parent=1 // pred_fallthru
      _
    %432 = vsyncpa [#allocation3], 1
    %433 = vsyncpa [#allocation5], 1

</llo_original>
